<compile_context>
chip_gen: v7x
topology: tpu7x:2x2x1
jax: 0.10.0
libtpu: 0.0.40
codegen_flags: <defaults>
</compile_context>

<pallas_src>
import functools
import math

import jax
import jax.numpy as jnp
from jax.experimental import pallas as pl
from jax.experimental.pallas import tpu as pltpu


def _round_up(x, m):
    return (x + m - 1) // m * m


def _silu(z):
    return z * jax.nn.sigmoid(z)


def _relu_sq(z):
    return jnp.square(jnp.maximum(z, 0.0))


# ----------------------------------------------------------------------------
# Tiled batched matmul: bf16 operands, f32 accumulator, fused epilogue
# ----------------------------------------------------------------------------

def _bmm_kernel(x_ref, w_ref, o_ref, acc_ref, *, act):
    @pl.when(pl.program_id(3) == 0)
    def _():
        acc_ref[...] = jnp.zeros_like(acc_ref)

    acc_ref[...] += jnp.dot(x_ref[0], w_ref[0],
                            preferred_element_type=jnp.float32)

    @pl.when(pl.program_id(3) == pl.num_programs(3) - 1)
    def _():
        out = acc_ref[...]
        if act is not None:
            out = act(out)
        o_ref[0] = out.astype(o_ref.dtype)


def pallas_bmm(x, w, act=None, out_dtype=jnp.float32,
               tm_max=512, tn_max=512, tk_max=512):
    """(G, M, K) @ (G, K, N) -> (G, M, N) with optional fused elementwise act."""
    G, M, K = x.shape
    G2, K2, N = w.shape
    assert G == G2 and K == K2

    tm = min(tm_max, _round_up(M, 8))       # sublane-aligned
    tk = min(tk_max, _round_up(K, 128))     # lane-aligned
    tn = min(tn_max, _round_up(N, 128))
    Mp, Kp, Np = _round_up(M, tm), _round_up(K, tk), _round_up(N, tn)

    xp = x.astype(jnp.bfloat16)
    wp = w.astype(jnp.bfloat16)
    if (Mp, Kp) != (M, K):
        xp = jnp.pad(xp, ((0, 0), (0, Mp - M), (0, Kp - K)))
    if (Kp, Np) != (K, N):
        wp = jnp.pad(wp, ((0, 0), (0, Kp - K), (0, Np - N)))

    flops = 2 * G * Mp * Np * Kp
    bytes_accessed = 2 * G * (Mp * Kp + Kp * Np) + 4 * G * Mp * Np

    out = pl.pallas_call(
        functools.partial(_bmm_kernel, act=act),
        out_shape=jax.ShapeDtypeStruct((G, Mp, Np), out_dtype),
        grid=(G, Mp // tm, Np // tn, Kp // tk),
        in_specs=[pl.BlockSpec((1, tm, tk), lambda g, i, j, k: (g, i, k)),
                  pl.BlockSpec((1, tk, tn), lambda g, i, j, k: (g, k, j))],
        out_specs=pl.BlockSpec((1, tm, tn), lambda g, i, j, k: (g, i, j)),
        scratch_shapes=[pltpu.VMEM((tm, tn), jnp.float32)],
        compiler_params=pltpu.CompilerParams(
            dimension_semantics=("parallel", "parallel", "parallel",
                                 "arbitrary")),
        cost_estimate=pl.CostEstimate(flops=flops, transcendentals=0,
                                      bytes_accessed=bytes_accessed),
    )(xp, wp)

    if (Mp, Np) != (M, N):
        out = out[:, :M, :N]
    return out


def pallas_matmul(x, w, act=None, out_dtype=jnp.float32):
    """(M, K) @ (K, N) -> (M, N)."""
    return pallas_bmm(x[None], w[None], act=act, out_dtype=out_dtype)[0]


def lin(x, w, act=None):
    # x: (B, T, Cin), w: (Cin, Cout)
    B, T, Cin = x.shape
    y = pallas_matmul(x.reshape(B * T, Cin), w, act=act)
    return y.reshape(B, T, w.shape[1])


# ----------------------------------------------------------------------------
# Chunked WKV (RWKV-v6 recurrence) kernel
# ----------------------------------------------------------------------------
#
# Per head (D = head dim), per time step:
#   y_t[e]  = sum_d r_t[d] * (u[d] * k_t[d] * v_t[e] + s_t[d, e])
#   s_{t+1} = k_t (x) v_t + diag(exp(-exp(w_t))) @ s_t
#
# Chunked over TC steps with lw = -exp(w) (log-decay, <= 0):
#   cum_incl[i] = sum_{j<=i} lw_j ,  cum_excl[i] = cum_incl[i] - lw_i
#   r_dec[i] = r_i * exp(cum_excl[i])            k_inv[j] = k_j * exp(-cum_incl[j])
#   k_rem[j] = k_j * exp(total - cum_incl[j])    (total = cum_incl[TC-1])
#   A[i,j]   = <r_dec[i], k_inv[j]>  for j<i ,   A[i,i] = <r_i*u, k_i>
#   y        = A @ v + r_dec @ s0
#   s_new    = exp(total)[:,None] * s0 + k_rem^T @ v
# i.e. the whole recurrence becomes batched MXU matmuls and the state is
# read/written once per chunk.

def _wkv_chunk_kernel(r_ref, k_ref, v_ref, lw_ref, u_ref, y_ref, s_ref):
    c = pl.program_id(1)

    @pl.when(c == 0)
    def _():
        s_ref[...] = jnp.zeros_like(s_ref)

    _, H, TC, D = r_ref.shape
    r = r_ref[0]            # (H, TC, D) f32, head-major (no in-kernel transpose)
    k = k_ref[0]
    v = v_ref[0]
    lw = lw_ref[0]          # log-decay, <= 0
    u = u_ref[...]          # (H, D)
    s0 = s_ref[...]         # (H, D, D)

    # Inclusive cumsum of log-decays via a lower-triangular batched matmul.
    ii = jax.lax.broadcasted_iota(jnp.int32, (TC, TC), 0)
    jj = jax.lax.broadcasted_iota(jnp.int32, (TC, TC), 1)
    tri_incl = jnp.broadcast_to((jj <= ii).astype(jnp.float32)[None],
                                (H, TC, TC))
    cum_incl = jnp.einsum('hij,hjd->hid', tri_incl, lw,
                          preferred_element_type=jnp.float32)
    cum_excl = cum_incl - lw
    total = cum_incl[:, TC - 1, :]                       # (H, D)

    r_dec = r * jnp.exp(cum_excl)
    k_inv = k * jnp.exp(-cum_incl)
    k_rem = k * jnp.exp(total[:, None, :] - cum_incl)

    # Intra-chunk interaction matrix (H, TC, TC): strict-lower decayed part
    # plus the "bonus" diagonal.
    a = jnp.einsum('hid,hjd->hij', r_dec, k_inv,
                   preferred_element_type=jnp.float32)
    diag = jnp.sum(r * u[:, None, :] * k, axis=-1)       # (H, TC)
    lower = jnp.broadcast_to((jj < ii)[None], (H, TC, TC))
    on_diag = jnp.broadcast_to((jj == ii)[None], (H, TC, TC))
    diag_b = jnp.broadcast_to(diag[:, :, None], (H, TC, TC))
    a = jnp.where(lower, a, jnp.where(on_diag, diag_b, 0.0))

    y = jnp.einsum('hij,hjd->hid', a, v, preferred_element_type=jnp.float32)
    y = y + jnp.einsum('hid,hde->hie', r_dec, s0,
                       preferred_element_type=jnp.float32)
    y_ref[0] = y.astype(y_ref.dtype)

    # Carry the state to the next chunk (decay along d, add new outer products).
    s_ref[...] = (jnp.exp(total)[:, :, None] * s0
                  + jnp.einsum('hjd,hje->hde', k_rem, v,
                               preferred_element_type=jnp.float32))


def rwkv_wkv(r, k, v, w, u, H, D, chunk=32):
    """Pallas implementation of RWKV_Kernel.

    r, k, v, w : (B, T, C) with C = H * D
    u          : (H, D)  (time_faaaa)
    returns    : (B, T, C) float32
    """
    B, T, C = r.shape
    assert C == H * D

    TC = min(chunk, _round_up(T, 8))     # chunk length (kept <= 32 for fp32 range)
    Tp = _round_up(T, TC)

    # Head-major layout (B, H, Tp, D); padded steps get lw=0 (decay 1) and
    # k=v=r=0, which leaves the carried state untouched.
    def to_bhtd(x):
        x = x.astype(jnp.float32).reshape(B, T, H, D).transpose(0, 2, 1, 3)
        if Tp != T:
            x = jnp.pad(x, ((0, 0), (0, 0), (0, Tp - T), (0, 0)))
        return x

    lw = -jnp.exp(w.astype(jnp.float32))   # log of per-step decay, <= 0
    rp, kp, vp, lwp = to_bhtd(r), to_bhtd(k), to_bhtd(v), to_bhtd(lw)

    spec_in = pl.BlockSpec((1, H, TC, D), lambda b, c: (b, 0, c, 0))
    y = pl.pallas_call(
        _wkv_chunk_kernel,
        out_shape=jax.ShapeDtypeStruct((B, H, Tp, D), jnp.float32),
        grid=(B, Tp // TC),
        in_specs=[spec_in, spec_in, spec_in, spec_in,
                  pl.BlockSpec((H, D), lambda b, c: (0, 0))],
        out_specs=pl.BlockSpec((1, H, TC, D), lambda b, c: (b, 0, c, 0)),
        scratch_shapes=[pltpu.VMEM((H, D, D), jnp.float32)],
        compiler_params=pltpu.CompilerParams(
            # batch axis is independent (uses both cores on v7x); the chunk
            # axis carries the recurrent state and must stay sequential.
            dimension_semantics=("parallel", "arbitrary")),
    )(rp, kp, vp, lwp, u.astype(jnp.float32))

    return y[:, :, :T, :].transpose(0, 2, 1, 3).reshape(B, T, C)


# ----------------------------------------------------------------------------
# Plain-JAX glue (normalizations, mixes, parameter setup)
# ----------------------------------------------------------------------------

def time_shift(x):
    # nn.ZeroPad2d((0, 0, 1, -1)) on (B, T, C): shift right in time, pad 0.
    return jnp.pad(x, ((0, 0), (1, 0), (0, 0)))[:, :-1, :]


def layer_norm(x, w, b, eps=1e-5):
    mean = x.mean(-1, keepdims=True)
    var = ((x - mean) ** 2).mean(-1, keepdims=True)
    return (x - mean) / jnp.sqrt(var + eps) * w + b


def group_norm(x, w, b, num_groups, eps):
    # x: (N, C)
    N, C = x.shape
    g = x.reshape(N, num_groups, C // num_groups)
    mean = g.mean(-1, keepdims=True)
    var = ((g - mean) ** 2).mean(-1, keepdims=True)
    g = (g - mean) / jnp.sqrt(var + eps)
    return g.reshape(N, C) * w + b


def _lin_w(key, fan_in, fan_out):
    bound = 1.0 / math.sqrt(fan_in)
    return jax.random.uniform(key, (fan_in, fan_out), jnp.float32, -bound, bound)


def init_tmix(key, args, layer_id):
    C = args['n_embd']
    A = args['dim_att']
    H = A // args['head_size_a']
    D = args['head_size_a']
    nl = args['n_layer']
    r01 = layer_id / (nl - 1)
    r10 = 1.0 - layer_id / nl
    keys = jax.random.split(key, 8)
    ddd = (jnp.arange(C, dtype=jnp.float32) / C).reshape(1, 1, C)
    n = jnp.arange(A, dtype=jnp.float32)

    p = {}
    p['time_maa_x'] = 1.0 - jnp.power(ddd, r10)
    p['time_maa_w'] = 1.0 - jnp.power(ddd, r10)
    p['time_maa_k'] = 1.0 - jnp.power(ddd, r10)
    p['time_maa_v'] = 1.0 - (jnp.power(ddd, r10) + 0.3 * r01)
    p['time_maa_r'] = 1.0 - jnp.power(ddd, 0.5 * r10)
    p['time_maa_g'] = 1.0 - jnp.power(ddd, 0.5 * r10)
    p['time_maa_w1'] = jnp.zeros((C, 32 * 5), jnp.float32)
    p['time_maa_w2'] = jax.random.uniform(keys[0], (5, 32, C), jnp.float32, -0.01, 0.01)

    p['time_decay'] = (-6.0 + 5.0 * (n / (A - 1)) ** (0.7 + 1.3 * r01)).reshape(1, 1, A)
    p['time_decay_w1'] = jnp.zeros((C, 64), jnp.float32)
    p['time_decay_w2'] = jax.random.uniform(keys[1], (64, A), jnp.float32, -0.01, 0.01)

    zig = ((n + 1) % 3 - 1) * 0.1
    p['time_faaaa'] = (r01 * (1.0 - n / (A - 1)) + zig).reshape(H, D)

    p['receptance'] = _lin_w(keys[2], C, A)
    p['key'] = _lin_w(keys[3], C, A)
    p['value'] = _lin_w(keys[4], C, A)
    p['output'] = _lin_w(keys[5], A, C)
    p['gate'] = _lin_w(keys[6], C, A)
    p['ln_x_w'] = jnp.ones((A,), jnp.float32)
    p['ln_x_b'] = jnp.zeros((A,), jnp.float32)
    return p


def init_cmix(key, args, layer_id):
    C = args['n_embd']
    F = args['dim_ffn']
    r10 = 1.0 - layer_id / args['n_layer']
    keys = jax.random.split(key, 3)
    ddd = (jnp.arange(C, dtype=jnp.float32) / C).reshape(1, 1, C)
    p = {}
    p['time_maa_k'] = 1.0 - jnp.power(ddd, r10)
    p['time_maa_r'] = 1.0 - jnp.power(ddd, r10)
    p['key'] = _lin_w(keys[0], C, F)
    p['receptance'] = _lin_w(keys[1], C, C)
    p['value'] = _lin_w(keys[2], F, C)
    return p


def init_rwkv(key, args):
    C = args['n_embd']
    V = args['vocab_size']
    keys = jax.random.split(key, 3 + args['n_layer'])
    p = {
        'emb': 0.1 * jax.random.normal(keys[0], (V, C), jnp.float32),
        'head': _lin_w(keys[1], C, V),
        'ln_out_w': jnp.ones((C,), jnp.float32),
        'ln_out_b': jnp.zeros((C,), jnp.float32),
        'blocks': [],
    }
    for i in range(args['n_layer']):
        bkeys = jax.random.split(keys[3 + i], 2)
        blk = {
            'ln1_w': jnp.ones((C,), jnp.float32), 'ln1_b': jnp.zeros((C,), jnp.float32),
            'ln2_w': jnp.ones((C,), jnp.float32), 'ln2_b': jnp.zeros((C,), jnp.float32),
            'att': init_tmix(bkeys[0], args, i),
            'ffn': init_cmix(bkeys[1], args, i),
        }
        if i == 0:
            blk['ln0_w'] = jnp.ones((C,), jnp.float32)
            blk['ln0_b'] = jnp.zeros((C,), jnp.float32)
        p['blocks'].append(blk)
    return p


def tmix_forward(p, x, args):
    B, T, C = x.shape
    A = args['dim_att']
    H = args['n_head']
    D = args['head_size_a']

    xx = time_shift(x) - x

    # data-dependent LoRA mixes: one matmul with fused tanh + one batched matmul
    xxx = x + xx * p['time_maa_x']
    lora = pallas_matmul(xxx.reshape(B * T, C), p['time_maa_w1'],
                         act=jnp.tanh)                         # (BT, 160)
    lora = lora.reshape(B * T, 5, -1).transpose(1, 0, 2)       # (5, BT, 32)
    mixes = pallas_bmm(lora, p['time_maa_w2']).reshape(5, B, T, C)
    mw, mk, mv, mr, mg = (mixes[i] for i in range(5))

    xw = x + xx * (p['time_maa_w'] + mw)
    xk = x + xx * (p['time_maa_k'] + mk)
    xv = x + xx * (p['time_maa_v'] + mv)
    xr = x + xx * (p['time_maa_r'] + mr)
    xg = x + xx * (p['time_maa_g'] + mg)

    r = lin(xr, p['receptance'])
    k = lin(xk, p['key'])
    v = lin(xv, p['value'])
    g = lin(xg, p['gate'], act=_silu)

    ww = pallas_matmul(
        pallas_matmul(xw.reshape(B * T, C), p['time_decay_w1'], act=jnp.tanh),
        p['time_decay_w2']).reshape(B, T, A)
    w = p['time_decay'] + ww

    x_att = rwkv_wkv(r, k, v, w, p['time_faaaa'], H, D)

    # jit_func_2
    eps = 1e-5 * args['head_size_divisor'] ** 2
    xf = group_norm(x_att.reshape(B * T, A), p['ln_x_w'], p['ln_x_b'], H, eps)
    xf = xf.reshape(B, T, A)
    return lin(xf * g, p['output'])


def cmix_forward(p, x):
    xx = time_shift(x) - x
    xk = x + xx * p['time_maa_k']
    xr = x + xx * p['time_maa_r']
    k = lin(xk, p['key'], act=_relu_sq)
    kv = lin(k, p['value'])
    rg = lin(xr, p['receptance'], act=jax.nn.sigmoid)
    return rg * kv


def block_forward(bp, x, args, layer_id):
    if layer_id == 0:
        x = layer_norm(x, bp['ln0_w'], bp['ln0_b'])
    x = x + tmix_forward(bp['att'], layer_norm(x, bp['ln1_w'], bp['ln1_b']), args)
    x = x + cmix_forward(bp['ffn'], layer_norm(x, bp['ln2_w'], bp['ln2_b']))
    return x


def rwkv_forward(params, idx, args):
    x = params['emb'][idx]                       # (B, T, C)
    for i, bp in enumerate(params['blocks']):
        x = block_forward(bp, x, args, i)
    x = layer_norm(x, params['ln_out_w'], params['ln_out_b'])
    return lin(x, params['head'])                # (B, T, vocab)


# ----------------------------------------------------------------------------
# main
# ----------------------------------------------------------------------------

if __name__ == "__main__":
    args = {
        'n_embd': 32,
        'n_layer': 2,
        'vocab_size': 16,
        'head_size_a': 16,
        'head_size_divisor': 8,
    }
    args['dim_att'] = args['n_embd']
    args['dim_ffn'] = int(args['n_embd'] * 3.5 // 32 * 32)
    args['n_head'] = args['dim_att'] // args['head_size_a']
    assert args['n_embd'] % 32 == 0
    assert args['dim_att'] % 32 == 0
    assert args['dim_ffn'] % 32 == 0

    key = jax.random.PRNGKey(0)
    pkey, ikey = jax.random.split(key)
    params = init_rwkv(pkey, args)

    B, T = 2, 8
    idx = jax.random.randint(ikey, (B, T), 0, args['vocab_size'], dtype=jnp.int32)

    logits = rwkv_forward(params, idx, args)
    logits = jax.block_until_ready(logits)
    assert logits.shape == (B, T, args['vocab_size'])
    assert bool(jnp.all(jnp.isfinite(logits)))
    print("KERNEL_OK")
</pallas_src>

<mosaic_0001>
module attributes {stable_mosaic.version = 11 : i64} {
  func.func @_bmm_kernel(%arg0: i32, %arg1: i32, %arg2: i32, %arg3: i32, %arg4: memref<1x16x128xbf16, #tpu.memory_space<vmem>>, %arg5: memref<1x128x256xbf16, #tpu.memory_space<vmem>>, %arg6: memref<1x16x256xf32, #tpu.memory_space<vmem>>, %arg7: memref<16x256xf32, #tpu.memory_space<vmem>>) attributes {dimension_semantics = [#tpu.dimension_semantics<parallel>, #tpu.dimension_semantics<parallel>, #tpu.dimension_semantics<parallel>, #tpu.dimension_semantics<arbitrary>], iteration_bounds = array<i64: 1, 1, 1, 1>, scalar_prefetch = 0 : i64, scratch_operands = 1 : i64, tpu.core_type = #tpu.core_type<tc>, window_params = [{transform_indices = @transform_0, window_bounds = array<i64: 1, 16, 128>}, {transform_indices = @transform_1, window_bounds = array<i64: 1, 128, 256>}, {transform_indices = @transform_2, window_bounds = array<i64: 1, 16, 256>}]} {
    %c0_i32 = arith.constant 0 : i32
    %0 = arith.cmpi eq, %arg3, %c0_i32 : i32
    %1 = arith.extui %0 : i1 to i32
    %c0_i32_0 = arith.constant 0 : i32
    %2 = arith.cmpi ne, %1, %c0_i32_0 : i32
    scf.if %2 {
      %cst_12 = arith.constant 0.000000e+00 : f32
      %14 = vector.broadcast %cst_12 : f32 to vector<16x256xf32>
      %c0_13 = arith.constant 0 : index
      %c0_14 = arith.constant 0 : index
      %15 = vector.load %arg7[%c0_13, %c0_14] : memref<16x256xf32, #tpu.memory_space<vmem>>, vector<16x256xf32>
      tpu.vector_store %arg7[%c0_13, %c0_14], %14 {strides = array<i32>} : memref<16x256xf32, #tpu.memory_space<vmem>>, vector<16x256xf32>,
    } else {
    }
    %c0 = arith.constant 0 : index
    %c0_1 = arith.constant 0 : index
    %3 = vector.load %arg7[%c0, %c0_1] : memref<16x256xf32, #tpu.memory_space<vmem>>, vector<16x256xf32>
    %c0_2 = arith.constant 0 : index
    %c0_3 = arith.constant 0 : index
    %c0_4 = arith.constant 0 : index
    %4 = vector.load %arg4[%c0_2, %c0_3, %c0_4] : memref<1x16x128xbf16, #tpu.memory_space<vmem>>, vector<1x16x128xbf16>
    %5 = vector.shape_cast %4 : vector<1x16x128xbf16> to vector<16x128xbf16>
    %c0_5 = arith.constant 0 : index
    %c0_6 = arith.constant 0 : index
    %c0_7 = arith.constant 0 : index
    %6 = vector.load %arg5[%c0_5, %c0_6, %c0_7] : memref<1x128x256xbf16, #tpu.memory_space<vmem>>, vector<1x128x256xbf16>
    %7 = vector.shape_cast %6 : vector<1x128x256xbf16> to vector<128x256xbf16>
    %cst = arith.constant dense<0.000000e+00> : vector<16x256xf32>
    %8 = tpu.matmul %5, %7, %cst {dimension_numbers = #tpu.dot_dimension_numbers<[1], [0], [0], [1], [0, 0, 1, 1], [], []>} : vector<16x128xbf16>, vector<128x256xbf16>, vector<16x256xf32> -> vector<16x256xf32>
    %9 = arith.addf %3, %8 : vector<16x256xf32>
    %c0_8 = arith.constant 0 : index
    %c0_9 = arith.constant 0 : index
    %10 = vector.load %arg7[%c0_8, %c0_9] : memref<16x256xf32, #tpu.memory_space<vmem>>, vector<16x256xf32>
    tpu.vector_store %arg7[%c0_8, %c0_9], %9 {strides = array<i32>} : memref<16x256xf32, #tpu.memory_space<vmem>>, vector<16x256xf32>,
    %c0_i32_10 = arith.constant 0 : i32
    %11 = arith.cmpi eq, %arg3, %c0_i32_10 : i32
    %12 = arith.extui %11 : i1 to i32
    %c0_i32_11 = arith.constant 0 : i32
    %13 = arith.cmpi ne, %12, %c0_i32_11 : i32
    scf.if %13 {
      %c0_12 = arith.constant 0 : index
      %c0_13 = arith.constant 0 : index
      %14 = vector.load %arg7[%c0_12, %c0_13] : memref<16x256xf32, #tpu.memory_space<vmem>>, vector<16x256xf32>
      %15 = math.tanh %14 : vector<16x256xf32>
      %c0_14 = arith.constant 0 : index
      %c0_15 = arith.constant 0 : index
      %c0_16 = arith.constant 0 : index
      %16 = vector.load %arg6[%c0_14, %c0_15, %c0_16] : memref<1x16x256xf32, #tpu.memory_space<vmem>>, vector<1x16x256xf32>
      %17 = vector.shape_cast %16 : vector<1x16x256xf32> to vector<16x256xf32>
      %18 = vector.shape_cast %15 : vector<16x256xf32> to vector<1x16x256xf32>
      tpu.vector_store %arg6[%c0_14, %c0_15, %c0_16], %18 {strides = array<i32>} : memref<1x16x256xf32, #tpu.memory_space<vmem>>, vector<1x16x256xf32>,
    } else {
    }
    return
  }
  func.func @transform_0(%arg0: i32, %arg1: i32, %arg2: i32, %arg3: i32) -> (i32, i32, i32) {
    %c0_i32 = arith.constant 0 : i32
    return %arg0, %arg1, %arg3 : i32, i32, i32
  }
  func.func @transform_1(%arg0: i32, %arg1: i32, %arg2: i32, %arg3: i32) -> (i32, i32, i32) {
    %c0_i32 = arith.constant 0 : i32
    return %arg0, %arg3, %arg2 : i32, i32, i32
  }
  func.func @transform_2(%arg0: i32, %arg1: i32, %arg2: i32, %arg3: i32) -> (i32, i32, i32) {
    %c0_i32 = arith.constant 0 : i32
    return %arg0, %arg1, %arg2 : i32, i32, i32
  }
}

</mosaic_0001>

<llo_original>
// kernel: tpu_custom_call.1
$region0: #{tpu_custom_call.1}
  #allocation0 [shape = 'u32[]', space=smem, size = 0x4, offset = 0x4, fixed_abs, tag = 'smem constant byte address 0x4 - core index']
  #allocation1 [shape = 'u32[144,128]{1,0:T(1,128)}', space=vmem, size = 0x12000, scoped, tag = 'internal scratch']
  #allocation2 [shape = 'f32[16,256]{1,0:T(8,128)}', space=vmem, size = 0x4000, scoped, tag = 'scratch operand']
  %s0 = inlined_call_operand.hbm [shape: bf16[1,16,128], index: 0, kind: input, shape index: {}]
  %s1 = inlined_call_operand.hbm [shape: bf16[1,128,256], index: 1, kind: input, shape index: {}]
  %s2 = inlined_call_operand.hbm [shape: f32[1,16,256], index: 2, kind: output, shape index: {}]
  %s3 = sld [smem:[#allocation0]]
  $region34: #{tpu_custom_call.1} parent=0
    _
  %s5 = ssub.s32 1, %s3
  %s6 = scalar_select 0, %s5, %s3
  $region1: #{tpu_custom_call.1} parent=0
    #allocation3 [shape = 'u8[4096]{0}', space=vmem, size = 0x1000, scoped, tag = 'input window, operand 0, single buffered']
    #allocation4 [shape = 's32[1]{0}', space=sflag, size = 0x4, scoped, tag = 'scoped memory for tpu_custom_call.1']
    #allocation5 [shape = 's32[1]{0}', space=sflag, size = 0x4, scoped, tag = 'scoped memory for tpu_custom_call.1']
    #allocation6 [shape = 'u8[65536]{0}', space=vmem, size = 0x10000, scoped, tag = 'input window, operand 1, single buffered']
    #allocation7 [shape = 's32[1]{0}', space=sflag, size = 0x4, scoped, tag = 'scoped memory for tpu_custom_call.1']
    #allocation8 [shape = 'u8[16384]{0}', space=vmem, size = 0x4000, scoped, tag = 'output window, operand 0, single buffered']
    %7 = vsyncpa [#allocation4], 0
    %8 = vsyncpa [#allocation7], 0
    %9 = vsyncpa [#allocation5], 0
    // Predicated region
    $region2: #{tpu_custom_call.1} parent=1 // pred_check
      _
    $region3: #{tpu_custom_call.1} parent=1 // pred_check_branch
      %11 = sbr.rel (0) target = $region5
    $region4: #{tpu_custom_call.1} parent=1 // pred_region
      %s13 = ssub.s32 128, 128
      %14 = vsyncadd [#allocation4], %s13
      %s15 = sshll.u32 [#allocation3], 4
      %s16 = int_to_ptr.vmem [resolvable:$true] %s15
      %21 = dma.hbm_to_vmem [thread:$0]  %s0, 128, %s16, [#allocation4], 64, 64, 4
    $region5: #{tpu_custom_call.1} parent=1 // pred_fallthru
      _
    // Predicated region
    $region6: #{tpu_custom_call.1} parent=1 // pred_check
      _
    $region7: #{tpu_custom_call.1} parent=1 // pred_check_branch
      %23 = sbr.rel (0) target = $region9
    $region8: #{tpu_custom_call.1} parent=1 // pred_region
      %s25 = ssub.s32 2048, 2048
      %26 = vsyncadd [#allocation7], %s25
      %s27 = sshll.u32 [#allocation6], 4
      %s28 = int_to_ptr.vmem [resolvable:$true] %s27
      %33 = dma.hbm_to_vmem [thread:$0]  %s1, 2048, %s28, [#allocation7], 128, 128, 8
    $region9: #{tpu_custom_call.1} parent=1 // pred_fallthru
      _
    // Predicated region
    $region10: #{tpu_custom_call.1} parent=1 // pred_check
      _
    $region11: #{tpu_custom_call.1} parent=1 // pred_check_branch
      %35 = sbr.rel (0) target = $region13
    $region12: #{tpu_custom_call.1} parent=1 // pred_region
      %36 = dma.done [#allocation4], 128
    $region13: #{tpu_custom_call.1} parent=1 // pred_fallthru
      _
    // Predicated region
    $region14: #{tpu_custom_call.1} parent=1 // pred_check
      _
    $region15: #{tpu_custom_call.1} parent=1 // pred_check_branch
      %38 = sbr.rel (0) target = $region17
    $region16: #{tpu_custom_call.1} parent=1 // pred_region
      %39 = dma.done [#allocation7], 2048
    $region17: #{tpu_custom_call.1} parent=1 // pred_fallthru
      _
    %p41 = scmp.eq.s32.totalorder 0, 0
    // Predicated region
    $region18: #{tpu_custom_call.1} parent=1 // pred_check
      %p42 = pneg %p41
    $region19: #{tpu_custom_call.1} parent=1 // pred_check_branch
      %44 = sbr.rel (%p42) target = $region21
    $region20: #{tpu_custom_call.1} parent=1 // pred_region
      %45 = vst [vmem:[#allocation2] sm:$0xff] 0.0
      %46 = vst [vmem:[#allocation2 + $0x8] sm:$0xff] 0.0
      %47 = vst [vmem:[#allocation2 + $0x10] sm:$0xff] 0.0
      %48 = vst [vmem:[#allocation2 + $0x18] sm:$0xff] 0.0
    $region21: #{tpu_custom_call.1} parent=1 // pred_fallthru
      _
    %v49 = vld [vmem:[#allocation2] sm:$0xff]
    %v50 = vld [vmem:[#allocation2 + $0x8] sm:$0xff]
    %v51 = vld [vmem:[#allocation2 + $0x10] sm:$0xff]
    %v52 = vld [vmem:[#allocation2 + $0x18] sm:$0xff]
    %v53 = vld [vmem:[#allocation3] sm:$0xf]
    %v54 = vld [vmem:[#allocation3 + $0x4] sm:$0xf]
    %v55 = vld [vmem:[#allocation6] sm:$0xff]
    %v56 = vld [vmem:[#allocation6 + $0x8] sm:$0xff]
    %v57 = vld [vmem:[#allocation6 + $0x10] sm:$0xff]
    %v58 = vld [vmem:[#allocation6 + $0x18] sm:$0xff]
    %v59 = vld [vmem:[#allocation6 + $0x20] sm:$0xff]
    %v60 = vld [vmem:[#allocation6 + $0x28] sm:$0xff]
    %v61 = vld [vmem:[#allocation6 + $0x30] sm:$0xff]
    %v62 = vld [vmem:[#allocation6 + $0x38] sm:$0xff]
    %v63 = vld [vmem:[#allocation6 + $0x40] sm:$0xff]
    %v64 = vld [vmem:[#allocation6 + $0x48] sm:$0xff]
    %v65 = vld [vmem:[#allocation6 + $0x50] sm:$0xff]
    %v66 = vld [vmem:[#allocation6 + $0x58] sm:$0xff]
    %v67 = vld [vmem:[#allocation6 + $0x60] sm:$0xff]
    %v68 = vld [vmem:[#allocation6 + $0x68] sm:$0xff]
    %v69 = vld [vmem:[#allocation6 + $0x70] sm:$0xff]
    %v70 = vld [vmem:[#allocation6 + $0x78] sm:$0xff]
    %v73 = vunpack.c.l.b16 %v53
    %v74 = vunpack.c.l.b16 %v54
    %v75 = vpack.c.b16 %v74, %v73
    %v93 = vunpack.c.l.b16 %v55
    %v94 = vunpack.c.h.b16 %v55
    %v95 = vunpack.c.l.b16 %v56
    %v96 = vunpack.c.h.b16 %v56
    %v97 = vunpack.c.l.b16 %v57
    %v98 = vunpack.c.h.b16 %v57
    %v99 = vunpack.c.l.b16 %v58
    %v100 = vunpack.c.h.b16 %v58
    %v101 = vunpack.c.l.b16 %v59
    %v102 = vunpack.c.h.b16 %v59
    %v103 = vunpack.c.l.b16 %v60
    %v104 = vunpack.c.h.b16 %v60
    %v105 = vunpack.c.l.b16 %v61
    %v106 = vunpack.c.h.b16 %v61
    %v107 = vunpack.c.l.b16 %v62
    %v108 = vunpack.c.h.b16 %v62
    %v109 = vunpack.c.l.b16 %v63
    %v110 = vunpack.c.h.b16 %v63
    %v111 = vunpack.c.l.b16 %v64
    %v112 = vunpack.c.h.b16 %v64
    %v113 = vunpack.c.l.b16 %v65
    %v114 = vunpack.c.h.b16 %v65
    %v115 = vunpack.c.l.b16 %v66
    %v116 = vunpack.c.h.b16 %v66
    %v117 = vunpack.c.l.b16 %v67
    %v118 = vunpack.c.h.b16 %v67
    %v119 = vunpack.c.l.b16 %v68
    %v120 = vunpack.c.h.b16 %v68
    %v121 = vunpack.c.l.b16 %v69
    %v122 = vunpack.c.h.b16 %v69
    %v123 = vunpack.c.l.b16 %v70
    %v124 = vunpack.c.h.b16 %v70
    %v125 = vpack.c.b16 %v95, %v93
    %v126 = vpack.c.b16 %v96, %v94
    %v127 = vpack.c.b16 %v99, %v97
    %v128 = vpack.c.b16 %v100, %v98
    %v129 = vpack.c.b16 %v103, %v101
    %v130 = vpack.c.b16 %v104, %v102
    %v131 = vpack.c.b16 %v107, %v105
    %v132 = vpack.c.b16 %v108, %v106
    %v133 = vpack.c.b16 %v111, %v109
    %v134 = vpack.c.b16 %v112, %v110
    %v135 = vpack.c.b16 %v115, %v113
    %v136 = vpack.c.b16 %v116, %v114
    %v137 = vpack.c.b16 %v119, %v117
    %v138 = vpack.c.b16 %v120, %v118
    %v139 = vpack.c.b16 %v123, %v121
    %v140 = vpack.c.b16 %v124, %v122
    %157 = vmatprep.subr.bf16.mxu0 %v126
    %158 = vmatpush1.bf16.msra.mxu0 %v125
    %159 = vmatprep.subr.bf16.mxu0 %v128
    %160 = vmatpush1.bf16.msra.mxu0 %v127
    %161 = vmatprep.subr.bf16.mxu0 %v130
    %162 = vmatpush1.bf16.msra.mxu0 %v129
    %163 = vmatprep.subr.bf16.mxu0 %v132
    %164 = vmatpush1.bf16.msra.mxu0 %v131
    %165 = vmatprep.subr.bf16.mxu0 %v134
    %166 = vmatpush1.bf16.msra.mxu0 %v133
    %167 = vmatprep.subr.bf16.mxu0 %v136
    %168 = vmatpush1.bf16.msra.mxu0 %v135
    %169 = vmatprep.subr.bf16.mxu0 %v138
    %170 = vmatpush1.bf16.msra.mxu0 %v137
    %171 = vmatprep.subr.bf16.mxu0 %v140
    %172 = vmatpush1.bf16.msra.mxu0 %v139
    %173 = vmatprep.subr.bf16.mxu0 0
    %174 = vmatpush1.bf16.msra.mxu0 0
    %175 = vmatprep.subr.bf16.mxu0 0
    %176 = vmatpush1.bf16.msra.mxu0 0
    %177 = vmatprep.subr.bf16.mxu0 0
    %178 = vmatpush1.bf16.msra.mxu0 0
    %179 = vmatprep.subr.bf16.mxu0 0
    %180 = vmatpush1.bf16.msra.mxu0 0
    %181 = vmatprep.subr.bf16.mxu0 0
    %182 = vmatpush1.bf16.msra.mxu0 0
    %183 = vmatprep.subr.bf16.mxu0 0
    %184 = vmatpush1.bf16.msra.mxu0 0
    %185 = vmatprep.subr.bf16.mxu0 0
    %186 = vmatpush1.bf16.msra.mxu0 0
    %187 = vmatprep.subr.bf16.mxu0 0
    %188 = vmatpush1.bf16.msra.mxu0 0
    %189 = vmatprep.mubr.bf16.mxu0 0
    %190 = vmatmul.mubr.bf16.gmra.mrb[0].mxu0 %v75
    %v191 = vpop.f32.mrb[0].mxu0
    %v192 = vadd.f32 0.0, %v191
    %v193 = vpop.f32.mrb[0].mxu0
    %v194 = vadd.f32 0.0, %v193
    %v195 = vpop.f32.mrb[0].mxu0
    %v196 = vadd.f32 0.0, %v195
    %v197 = vpop.f32.mrb[0].mxu0
    %v198 = vadd.f32 0.0, %v197
    %199 = vdwg.mxu0
    %v200 = vadd.f32 %v49, %v192
    %v201 = vadd.f32 %v50, %v194
    %v202 = vadd.f32 %v51, %v196
    %v203 = vadd.f32 %v52, %v198
    %204 = vst [vmem:[#allocation2] sm:$0xff] %v200
    %205 = vst [vmem:[#allocation2 + $0x8] sm:$0xff] %v201
    %206 = vst [vmem:[#allocation2 + $0x10] sm:$0xff] %v202
    %207 = vst [vmem:[#allocation2 + $0x18] sm:$0xff] %v203
    // Predicated region
    $region22: #{tpu_custom_call.1} parent=1 // pred_check
      %p208 = pneg %p41
    $region23: #{tpu_custom_call.1} parent=1 // pred_check_branch
      %210 = sbr.rel (%p208) target = $region25
    $region24: #{tpu_custom_call.1} parent=1 // pred_region
      %v211 = vld [vmem:[#allocation2] sm:$0xff]
      %v212 = vld [vmem:[#allocation2 + $0x8] sm:$0xff]
      %v213 = vld [vmem:[#allocation2 + $0x10] sm:$0xff]
      %v214 = vld [vmem:[#allocation2 + $0x18] sm:$0xff]
      %v215 = vtanh.pop %v211
      %v216 = vtanh.pop %v212
      %v217 = vtanh.pop %v213
      %v218 = vtanh.pop %v214
      %219 = vst [vmem:[#allocation8] sm:$0xff] %v215
      %220 = vst [vmem:[#allocation8 + $0x8] sm:$0xff] %v216
      %221 = vst [vmem:[#allocation8 + $0x10] sm:$0xff] %v217
      %222 = vst [vmem:[#allocation8 + $0x18] sm:$0xff] %v218
    $region25: #{tpu_custom_call.1} parent=1 // pred_fallthru
      _
    // Predicated region
    $region26: #{tpu_custom_call.1} parent=1 // pred_check
      _
    $region27: #{tpu_custom_call.1} parent=1 // pred_check_branch
      %224 = sbr.rel (0) target = $region29
    $region28: #{tpu_custom_call.1} parent=1 // pred_region
      %s226 = ssub.s32 512, 512
      %227 = vsyncadd [#allocation5], %s226
      %s228 = sshll.u32 [#allocation8], 4
      %s229 = int_to_ptr.vmem [resolvable:$true] %s228
      %234 = dma.vmem_to_hbm [thread:$0]  %s229, 512, %s2, [#allocation5], 256, 256, 16
    $region29: #{tpu_custom_call.1} parent=1 // pred_fallthru
      _
    // Predicated region
    $region30: #{tpu_custom_call.1} parent=1 // pred_check
      _
    $region31: #{tpu_custom_call.1} parent=1 // pred_check_branch
      %236 = sbr.rel (0) target = $region33
    $region32: #{tpu_custom_call.1} parent=1 // pred_region
      %237 = dma.done [#allocation5], 512
    $region33: #{tpu_custom_call.1} parent=1 // pred_fallthru
      _
    %238 = vsyncpa [#allocation4], 1
    %239 = vsyncpa [#allocation7], 1
    %240 = vsyncpa [#allocation5], 1

</llo_original>
